<compile_context>
chip_gen: v7x
topology: tpu7x:2x2x1
jax: 0.10.0
libtpu: 0.0.40
codegen_flags: <defaults>
</compile_context>

<pallas_src>
import jax
import jax.numpy as jnp
from jax.experimental import pallas as pl
from jax.experimental.pallas import tpu as pltpu

EPS = 1e-5


def layernorm_kernel(x_ref, scale_ref, shift_ref, o_ref):
    # x_ref: (row_tile, D) VMEM tile; scale_ref / shift_ref: (1, D).
    x = x_ref[...].astype(jnp.float32)
    d = x.shape[-1]
    # Single-pass statistics: one pair of XLU reductions instead of the
    # two-pass mean -> (x-mean)^2 form.
    s = jnp.sum(x, axis=-1, keepdims=True)
    ss = jnp.sum(x * x, axis=-1, keepdims=True)
    mean = s * (1.0 / d)
    # torch.var(dim=-1) default is unbiased -> divide by (D - 1).
    denom = d - 1 if d > 1 else 1  # guard the degenerate D == 1 shape
    # Clamp: the single-pass form can go slightly negative from f32
    # cancellation on large-mean data; eps alone may not cover it and rsqrt
    # would return NaN. One VPU max on an HBM-bound kernel is free.
    var = jnp.maximum(ss - s * mean, 0.0) * (1.0 / denom)
    inv = jax.lax.rsqrt(var + EPS)  # EUP rsqrt: otherwise-idle slot, ~free
    scale = scale_ref[...].astype(jnp.float32)
    shift = shift_ref[...].astype(jnp.float32)
    o_ref[...] = ((x - mean) * inv * scale + shift).astype(o_ref.dtype)


def _sublane_multiple(dtype):
    # Sublane packing: 8 rows per vreg for 32-bit, 16 for 16-bit, 32 for 8-bit.
    return {4: 8, 2: 16, 1: 32}.get(jnp.dtype(dtype).itemsize, 8)


def _tpu_generation_params():
    """Returns (target_block_bytes, min_grid_steps, prefer_even_steps,
    vmem_limit_bytes), keyed off the chip's VMEM capacity.

    - >= ~100 MiB VMEM (v5e/v6e): single TensorCore, the grid is a serial
      loop, so never shrink the tile just to make more steps; 8 MiB blocks
      (2x in + 2x out + f32 temps stays well under an 80 MiB limit).
    - otherwise / unknown (v7x, 64 MiB per-TC): 6 MiB blocks, keep >= 4 and
      preferably an even number of grid steps so both TensorCores get
      balanced work; double-buffered in+out (24 MiB) + internal f32
      temporaries fits comfortably under a 48 MiB limit.
    """
    vmem_bytes = None
    try:
        vmem_bytes = pltpu.get_tpu_info().vmem_capacity_bytes
    except Exception:  # pragma: no cover - query unavailable -> conservative
        vmem_bytes = None
    if vmem_bytes is not None and vmem_bytes >= (100 << 20):
        return (8 << 20, 1, False, 80 << 20)
    return (6 << 20, 4, True, 48 << 20)


def _pick_row_tile(rows, d, dtype, target_block_bytes, min_grid_steps,
                   prefer_even_steps):
    """Largest row tile with ~target_block_bytes per block, rounded to the
    dtype sublane multiple; on multi-TC chips, keeps enough (and preferably
    an even number of) grid steps for core balance."""
    itemsize = jnp.dtype(dtype).itemsize
    sub = _sublane_multiple(dtype)
    rows_up = ((rows + sub - 1) // sub) * sub
    rt = max(sub, (target_block_bytes // (itemsize * d)) // sub * sub)
    rt = min(rt, rows_up)
    # Multi-TC chips only: keep a few grid steps so "parallel" can shard.
    if (min_grid_steps > 1 and rows_up >= min_grid_steps * sub
            and rows_up // rt < min_grid_steps):
        rt = max(sub, (rows_up // min_grid_steps) // sub * sub)
    if prefer_even_steps:
        steps = -(-rows_up // rt)
        if steps > 1 and steps % 2 == 1:
            # Nudge the tile down so the step count becomes even; otherwise
            # one v7x core idles for a full block at the ragged tail.
            rt2 = -(-rows_up // (steps + 1))
            rt2 = max(sub, min(((rt2 + sub - 1) // sub) * sub, rows_up))
            if (-(-rows_up // rt2)) % 2 == 0:
                rt = rt2
    return rt


def layer_norm(x, scale, shift, *, row_tile=None):
    """x: (..., D) float array; scale/shift: (D,)."""
    orig_shape = x.shape
    D = orig_shape[-1]
    # For a contiguous row-major x this reshape is a bitcast, not an HBM copy.
    x2 = x.reshape(-1, D)
    R = x2.shape[0]

    target_block_bytes, min_grid_steps, prefer_even, vmem_limit = (
        _tpu_generation_params())
    if row_tile is None:
        row_tile = _pick_row_tile(R, D, x.dtype, target_block_bytes,
                                  min_grid_steps, prefer_even)

    scale2 = scale.reshape(1, D)
    shift2 = shift.reshape(1, D)

    # Ragged last block instead of pad/concat + slice: out-of-bounds rows are
    # computed on garbage but never written to valid output rows.
    grid = (pl.cdiv(R, row_tile),)

    out = pl.pallas_call(
        layernorm_kernel,
        out_shape=jax.ShapeDtypeStruct((R, D), x.dtype),
        grid_spec=pltpu.PrefetchScalarGridSpec(
            num_scalar_prefetch=0,
            grid=grid,
            in_specs=[
                pl.BlockSpec((row_tile, D), lambda i: (i, 0)),
                pl.BlockSpec((1, D), lambda i: (0, 0)),
                pl.BlockSpec((1, D), lambda i: (0, 0)),
            ],
            out_specs=pl.BlockSpec((row_tile, D), lambda i: (i, 0)),
        ),
        compiler_params=pltpu.CompilerParams(
            dimension_semantics=("parallel",),
            vmem_limit_bytes=vmem_limit,
        ),
    )(x2, scale2, shift2)

    return out.reshape(orig_shape)


if __name__ == "__main__":
    key = jax.random.PRNGKey(0)
    batch, seq, emb_dim = 2, 8, 128  # lane-dense last dim (GPT-125M uses 768)

    x = jax.random.normal(key, (batch, seq, emb_dim), dtype=jnp.float32)

    # Deterministic parameter init matching nn.Parameter(zeros)/(ones)
    shift = jnp.zeros((emb_dim,), dtype=jnp.float32)
    scale = jnp.ones((emb_dim,), dtype=jnp.float32)

    out = layer_norm(x, scale, shift)
    jax.block_until_ready(out)

    # Pure-JAX reference (unbiased variance, matching torch.var default)
    mean = jnp.mean(x, axis=-1, keepdims=True)
    var = jnp.sum((x - mean) ** 2, axis=-1, keepdims=True) / (emb_dim - 1)
    ref = scale * ((x - mean) / jnp.sqrt(var + EPS)) + shift
    assert jnp.allclose(out, ref, atol=1e-5, rtol=1e-5), "mismatch vs reference"

    print("KERNEL_OK")
</pallas_src>

<mosaic_0001>
module attributes {stable_mosaic.version = 11 : i64} {
  func.func @layernorm_kernel(%arg0: i32, %arg1: memref<16x128xf32, #tpu.memory_space<vmem>>, %arg2: memref<1x128xf32, #tpu.memory_space<vmem>>, %arg3: memref<1x128xf32, #tpu.memory_space<vmem>>, %arg4: memref<16x128xf32, #tpu.memory_space<vmem>>) attributes {dimension_semantics = [#tpu.dimension_semantics<parallel>], iteration_bounds = array<i64: 1>, scalar_prefetch = 0 : i64, scratch_operands = 0 : i64, tpu.core_type = #tpu.core_type<tc>, window_params = [{transform_indices = @transform_0, window_bounds = array<i64: 16, 128>}, {pipeline_mode = #tpu.pipeline_mode<synchronous>, transform_indices = @transform_1, window_bounds = array<i64: 1, 128>}, {pipeline_mode = #tpu.pipeline_mode<synchronous>, transform_indices = @transform_2, window_bounds = array<i64: 1, 128>}, {transform_indices = @transform_3, window_bounds = array<i64: 16, 128>}]} {
    %c0 = arith.constant 0 : index
    %c0_0 = arith.constant 0 : index
    %0 = vector.load %arg1[%c0, %c0_0] : memref<16x128xf32, #tpu.memory_space<vmem>>, vector<16x128xf32>
    %cst = arith.constant dense<0.000000e+00> : vector<16xf32>
    %1 = vector.multi_reduction <add>, %0, %cst [1] : vector<16x128xf32> to vector<16xf32>
    %2 = vector.shape_cast %1 : vector<16xf32> to vector<16x1xf32>
    %3 = arith.mulf %0, %0 : vector<16x128xf32>
    %cst_1 = arith.constant dense<0.000000e+00> : vector<16xf32>
    %4 = vector.multi_reduction <add>, %3, %cst_1 [1] : vector<16x128xf32> to vector<16xf32>
    %5 = vector.shape_cast %4 : vector<16xf32> to vector<16x1xf32>
    %cst_2 = arith.constant 7.812500e-03 : f32
    %6 = vector.broadcast %cst_2 : f32 to vector<16x1xf32>
    %7 = arith.mulf %2, %6 : vector<16x1xf32>
    %8 = arith.mulf %2, %7 : vector<16x1xf32>
    %9 = arith.subf %5, %8 : vector<16x1xf32>
    %cst_3 = arith.constant 0.000000e+00 : f32
    %10 = vector.broadcast %cst_3 : f32 to vector<16x1xf32>
    %11 = arith.maximumf %9, %10 : vector<16x1xf32>
    %cst_4 = arith.constant 0.00787401571 : f32
    %12 = vector.broadcast %cst_4 : f32 to vector<16x1xf32>
    %13 = arith.mulf %11, %12 : vector<16x1xf32>
    %cst_5 = arith.constant 9.99999974E-6 : f32
    %14 = vector.broadcast %cst_5 : f32 to vector<16x1xf32>
    %15 = arith.addf %13, %14 : vector<16x1xf32>
    %16 = math.rsqrt %15 : vector<16x1xf32>
    %c0_6 = arith.constant 0 : index
    %c0_7 = arith.constant 0 : index
    %17 = vector.load %arg2[%c0_6, %c0_7] : memref<1x128xf32, #tpu.memory_space<vmem>>, vector<1x128xf32>
    %c0_8 = arith.constant 0 : index
    %c0_9 = arith.constant 0 : index
    %18 = vector.load %arg3[%c0_8, %c0_9] : memref<1x128xf32, #tpu.memory_space<vmem>>, vector<1x128xf32>
    %19 = vector.broadcast %7 : vector<16x1xf32> to vector<16x128xf32>
    %20 = arith.subf %0, %19 : vector<16x128xf32>
    %21 = vector.broadcast %16 : vector<16x1xf32> to vector<16x128xf32>
    %22 = arith.mulf %20, %21 : vector<16x128xf32>
    %23 = vector.broadcast %17 : vector<1x128xf32> to vector<16x128xf32>
    %24 = arith.mulf %22, %23 : vector<16x128xf32>
    %25 = vector.broadcast %18 : vector<1x128xf32> to vector<16x128xf32>
    %26 = arith.addf %24, %25 : vector<16x128xf32>
    %c0_10 = arith.constant 0 : index
    %c0_11 = arith.constant 0 : index
    %27 = vector.load %arg4[%c0_10, %c0_11] : memref<16x128xf32, #tpu.memory_space<vmem>>, vector<16x128xf32>
    tpu.vector_store %arg4[%c0_10, %c0_11], %26 {strides = array<i32>} : memref<16x128xf32, #tpu.memory_space<vmem>>, vector<16x128xf32>,
    return
  }
  func.func @transform_0(%arg0: i32) -> (i32, i32) {
    %c0_i32 = arith.constant 0 : i32
    %c0_i32_0 = arith.constant 0 : i32
    return %arg0, %c0_i32 : i32, i32
  }
  func.func @transform_1(%arg0: i32) -> (i32, i32) {
    %c0_i32 = arith.constant 0 : i32
    %c0_i32_0 = arith.constant 0 : i32
    %c0_i32_1 = arith.constant 0 : i32
    return %c0_i32, %c0_i32_0 : i32, i32
  }
  func.func @transform_2(%arg0: i32) -> (i32, i32) {
    %c0_i32 = arith.constant 0 : i32
    %c0_i32_0 = arith.constant 0 : i32
    %c0_i32_1 = arith.constant 0 : i32
    return %c0_i32, %c0_i32_0 : i32, i32
  }
  func.func @transform_3(%arg0: i32) -> (i32, i32) {
    %c0_i32 = arith.constant 0 : i32
    %c0_i32_0 = arith.constant 0 : i32
    return %arg0, %c0_i32 : i32, i32
  }
}

</mosaic_0001>

<llo_original>
// kernel: tpu_custom_call.1
$region0: #{tpu_custom_call.1}
  #allocation0 [shape = 'u32[]', space=smem, size = 0x4, offset = 0x4, fixed_abs, tag = 'smem constant byte address 0x4 - core index']
  #allocation1 [shape = 'u32[144,128]{1,0:T(1,128)}', space=vmem, size = 0x12000, scoped, tag = 'internal scratch']
  %s0 = inlined_call_operand.hbm [shape: f32[16,128], index: 0, kind: input, shape index: {}]
  %s1 = inlined_call_operand.vmem [shape: f32[1,128], index: 1, kind: input, shape index: {}]
  %s2 = inlined_call_operand.vmem [shape: f32[1,128], index: 2, kind: input, shape index: {}]
  %s3 = inlined_call_operand.hbm [shape: f32[16,128], index: 3, kind: output, shape index: {}]
  %s4 = sld [smem:[#allocation0]]
  $region26: #{tpu_custom_call.1} parent=0
    _
  %s6 = ssub.s32 1, %s4
  %s7 = scalar_select 0, %s6, %s4
  $region1: #{tpu_custom_call.1} parent=0
    #allocation2 [shape = 'u8[8192]{0}', space=vmem, size = 0x2000, scoped, tag = 'input window, operand 0, single buffered']
    #allocation3 [shape = 's32[1]{0}', space=sflag, size = 0x4, scoped, tag = 'scoped memory for tpu_custom_call.1']
    #allocation4 [shape = 's32[1]{0}', space=sflag, size = 0x4, scoped, tag = 'scoped memory for tpu_custom_call.1']
    #allocation5 [shape = 'u8[8192]{0}', space=vmem, size = 0x2000, scoped, tag = 'output window, operand 0, single buffered']
    %8 = vsyncpa [#allocation3], 0
    %9 = vsyncpa [#allocation4], 0
    // Predicated region
    $region2: #{tpu_custom_call.1} parent=1 // pred_check
      _
    $region3: #{tpu_custom_call.1} parent=1 // pred_check_branch
      %11 = sbr.rel (0) target = $region5
    $region4: #{tpu_custom_call.1} parent=1 // pred_region
      %s13 = ssub.s32 256, 256
      %14 = vsyncadd [#allocation3], %s13
      %s15 = sshll.u32 [#allocation2], 4
      %s16 = int_to_ptr.vmem [resolvable:$true] %s15
      %21 = dma.hbm_to_vmem [thread:$0]  %s0, 256, %s16, [#allocation3], 128, 128, 8
    $region5: #{tpu_custom_call.1} parent=1 // pred_fallthru
      _
    // Predicated region
    $region6: #{tpu_custom_call.1} parent=1 // pred_check
      _
    $region7: #{tpu_custom_call.1} parent=1 // pred_check_branch
      %23 = sbr.rel (0) target = $region9
    $region8: #{tpu_custom_call.1} parent=1 // pred_region
      _
    $region9: #{tpu_custom_call.1} parent=1 // pred_fallthru
      _
    // Predicated region
    $region10: #{tpu_custom_call.1} parent=1 // pred_check
      _
    $region11: #{tpu_custom_call.1} parent=1 // pred_check_branch
      %25 = sbr.rel (0) target = $region13
    $region12: #{tpu_custom_call.1} parent=1 // pred_region
      _
    $region13: #{tpu_custom_call.1} parent=1 // pred_fallthru
      _
    // Predicated region
    $region14: #{tpu_custom_call.1} parent=1 // pred_check
      _
    $region15: #{tpu_custom_call.1} parent=1 // pred_check_branch
      %27 = sbr.rel (0) target = $region17
    $region16: #{tpu_custom_call.1} parent=1 // pred_region
      %28 = dma.done [#allocation3], 256
    $region17: #{tpu_custom_call.1} parent=1 // pred_fallthru
      _
    %v29 = vld [vmem:[#allocation2] sm:$0xff]
    %v30 = vld [vmem:[#allocation2 + $0x8] sm:$0xff]
    %31 = vadd.xlane.f32.xlu0 %v29
    %v32 = vpop.xlane.xlu0 %31
    %33 = vadd.xlane.f32.xlu0 %v30
    %v34 = vpop.xlane.xlu0 %33
    %v35 = vmul.f32 %v29, %v29
    %v36 = vmul.f32 %v30, %v30
    %37 = vadd.xlane.f32.xlu0 %v35
    %v38 = vpop.xlane.xlu0 %37
    %39 = vadd.xlane.f32.xlu0 %v36
    %v40 = vpop.xlane.xlu0 %39
    %v41 = vmul.f32 %v32, 0.0078125
    %v42 = vmul.f32 %v34, 0.0078125
    %v43 = vmul.f32 %v32, %v41
    %v44 = vmul.f32 %v34, %v42
    %v45 = vsub.f32 %v38, %v43
    %v46 = vsub.f32 %v40, %v44
    %v47 = vmax.f32 %v45, 0.0
    %v48 = vmax.f32 %v46, 0.0
    %v49 = vmul.f32 %v47, 0.007874016
    %v50 = vmul.f32 %v48, 0.007874016
    %v51 = vadd.f32 %v49, 1e-05
    %v52 = vadd.f32 %v50, 1e-05
    %v53 = vrsqrt.pop %v51
    %v54 = vrsqrt.pop %v52
    %v55 = vld [vmem:[%s1] sm:$0x1]
    %v56 = vld [vmem:[%s2] sm:$0x1]
    %v57 = vsub.f32 %v29, %v41
    %v58 = vsub.f32 %v30, %v42
    %v59 = vmul.f32 %v57, %v53
    %v60 = vmul.f32 %v58, %v54
    %v62 = vlaneseq
    %v63 = vshrl.u32 %v62, 7
    %v64 = vsub.s32 0, %v63
    %v65 = vrot.slane %v55, %v64
    %v67 = vmul.f32 %v59, %v65
    %v68 = vmul.f32 %v60, %v65
    %v70 = vlaneseq
    %v71 = vshrl.u32 %v70, 7
    %v72 = vsub.s32 0, %v71
    %v73 = vrot.slane %v56, %v72
    %v75 = vadd.f32 %v67, %v73
    %v76 = vadd.f32 %v68, %v73
    %77 = vst [vmem:[#allocation5] sm:$0xff] %v75
    %78 = vst [vmem:[#allocation5 + $0x8] sm:$0xff] %v76
    // Predicated region
    $region18: #{tpu_custom_call.1} parent=1 // pred_check
      _
    $region19: #{tpu_custom_call.1} parent=1 // pred_check_branch
      %80 = sbr.rel (0) target = $region21
    $region20: #{tpu_custom_call.1} parent=1 // pred_region
      %s82 = ssub.s32 256, 256
      %83 = vsyncadd [#allocation4], %s82
      %s84 = sshll.u32 [#allocation5], 4
      %s85 = int_to_ptr.vmem [resolvable:$true] %s84
      %90 = dma.vmem_to_hbm [thread:$0]  %s85, 256, %s3, [#allocation4], 128, 128, 8
    $region21: #{tpu_custom_call.1} parent=1 // pred_fallthru
      _
    // Predicated region
    $region22: #{tpu_custom_call.1} parent=1 // pred_check
      _
    $region23: #{tpu_custom_call.1} parent=1 // pred_check_branch
      %92 = sbr.rel (0) target = $region25
    $region24: #{tpu_custom_call.1} parent=1 // pred_region
      %93 = dma.done [#allocation4], 256
    $region25: #{tpu_custom_call.1} parent=1 // pred_fallthru
      _
    %94 = vsyncpa [#allocation3], 1
    %95 = vsyncpa [#allocation4], 1

</llo_original>
